<compile_context>
chip_gen: v6e
topology: v6e:2x2x1
jax: 0.10.0
libtpu: 0.0.40
codegen_flags: <defaults>
</compile_context>

<pallas_src>
import jax
import jax.numpy as jnp
import numpy as np
from jax.experimental import pallas as pl
from jax.experimental.pallas import tpu as pltpu


def _round_up(x, m):
    return (x + m - 1) // m * m


def _make_gather_kernel(tile_m, in_flight):
    def kernel(idx_ref, table_hbm, out_ref, sems):
        # idx_ref:   SMEM (Np,)      int32  fused (x + offsets) row indices
        # table_hbm: HBM  (V, D)     f32    embedding table (never fully in VMEM)
        # out_ref:   VMEM (tile_m,D) f32    gathered embeddings for this row tile
        # sems:      DMA semaphores, ring of `in_flight` slots
        base = pl.program_id(0) * tile_m

        def row_copy(r, slot):
            row = idx_ref[base + r]
            return pltpu.make_async_copy(
                table_hbm.at[pl.ds(row, 1), :],   # (1, D) row in HBM
                out_ref.at[pl.ds(r, 1), :],       # (1, D) row of the output block
                sems.at[slot],
            )

        # Prime: start the first `in_flight` row gathers.
        @pl.loop(0, in_flight)
        def _(r):
            row_copy(r, r).start()

        # Steady state: wait for row r, then refill its semaphore slot with row
        # r + in_flight.  All copies have identical size, so re-building the
        # descriptor for the wait is safe.
        @pl.loop(0, tile_m)
        def _(r):
            slot = r % in_flight
            row_copy(r, slot).wait()

            @pl.when(r + in_flight < tile_m)
            def _():
                row_copy(r + in_flight, slot).start()

    return kernel


def features_embedding(x, table, offsets, *, tile_m=256, in_flight=8):
    """x: (B, F) int32, table: (V, D) f32, offsets: (F,) int32 -> (B, F, D) f32."""
    B, F = x.shape
    V, D = table.shape
    N = B * F

    # Keep >= 2 row tiles when possible so both v7x TensorCores get work, but
    # never drop below the 8-row sublane granule.
    tile_m = max(8, min(tile_m, _round_up(pl.cdiv(N, 2), 8)))
    in_flight = min(in_flight, tile_m)
    Np = _round_up(N, tile_m)

    # Fused, flattened, padded row indices.  Padding rows -> table row 0
    # (always a valid row), sliced off below.
    idx = (x.astype(jnp.int32) + offsets.astype(jnp.int32)[None, :]).reshape(N)
    idx_pad = jnp.zeros((Np,), jnp.int32).at[:N].set(idx)

    grid = (Np // tile_m,)

    out = pl.pallas_call(
        _make_gather_kernel(tile_m, in_flight),
        out_shape=jax.ShapeDtypeStruct((Np, D), table.dtype),
        grid_spec=pltpu.PrefetchScalarGridSpec(
            num_scalar_prefetch=1,                       # idx_pad -> SMEM
            grid=grid,
            in_specs=[pl.BlockSpec(memory_space=pl.ANY)],  # table stays in HBM
            out_specs=pl.BlockSpec((tile_m, D), lambda i, idx_ref: (i, 0)),
            scratch_shapes=[pltpu.SemaphoreType.DMA((in_flight,))],
        ),
        compiler_params=pltpu.CompilerParams(
            dimension_semantics=("parallel",),
        ),
    )(idx_pad, table)

    return out[:N].reshape(B, F, D)


if __name__ == "__main__":
    # Small, deterministic config consistent with the module.
    field_dims = [10, 20, 30]
    embed_dim = 32
    B = 2
    F = len(field_dims)
    V = int(sum(field_dims))

    key = jax.random.PRNGKey(0)
    k_w, k_x = jax.random.split(key)

    # nn.init.xavier_uniform_ on weight (V, D): bound = sqrt(6 / (V + D))
    bound = float(np.sqrt(6.0 / (V + embed_dim)))
    table = jax.random.uniform(k_w, (V, embed_dim), jnp.float32, -bound, bound)

    # offsets = (0, cumsum(field_dims)[:-1])
    offsets = jnp.asarray(
        np.array((0, *np.cumsum(field_dims)[:-1]), dtype=np.int32)
    )

    # valid per-field indices in [0, field_dims[f])
    maxvals = jnp.asarray(field_dims, dtype=jnp.int32)[None, :]
    x = jax.random.randint(k_x, (B, F), 0, 1 << 30, dtype=jnp.int32) % maxvals

    out = features_embedding(x, table, offsets)
    out = jax.block_until_ready(out)

    # Pure-JAX reference (same semantics as the torch forward).
    ref = jnp.take(table, x + offsets[None, :], axis=0)
    assert out.shape == (B, F, embed_dim)
    # The kernel is an exact row copy, so results must match bit-for-bit.
    np.testing.assert_allclose(np.asarray(out), np.asarray(ref), rtol=0, atol=0)
    print("KERNEL_OK")
</pallas_src>

<mosaic_0001>
module attributes {stable_mosaic.version = 11 : i64} {
  func.func @kernel(%arg0: i32, %arg1: memref<8xi32, #tpu.memory_space<smem>>, %arg2: memref<60x32xf32, #tpu.memory_space<any>>, %arg3: memref<8x32xf32, #tpu.memory_space<vmem>>, %arg4: memref<8x!tpu.dma_semaphore, #tpu.memory_space<semaphore_mem>>) attributes {dimension_semantics = [#tpu.dimension_semantics<parallel>], iteration_bounds = array<i64: 1>, scalar_prefetch = 1 : i64, scratch_operands = 1 : i64, tpu.core_type = #tpu.core_type<tc>, window_params = [{}, {transform_indices = @transform_1, window_bounds = array<i64: 8, 32>}]} {
    %c8_i32 = arith.constant 8 : i32
    %0 = arith.muli %arg0, %c8_i32 : i32
    %c0_i32 = arith.constant 0 : i32
    %c8_i32_0 = arith.constant 8 : i32
    %1 = arith.addi %c0_i32, %c8_i32_0 : i32
    %c1_i32 = arith.constant 1 : i32
    scf.for %arg5 = %c0_i32 to %1 step %c1_i32  : i32 {
      %c1_i32_6 = arith.constant 1 : i32
      %3 = arith.muli %arg5, %c1_i32_6 : i32
      %c0_i32_7 = arith.constant 0 : i32
      %4 = arith.addi %c0_i32_7, %3 : i32
      %5 = arith.addi %0, %4 : i32
      %6 = arith.index_cast %5 : i32 to index
      %7 = memref.load %arg1[%6] : memref<8xi32, #tpu.memory_space<smem>>
      %c0_i32_8 = arith.constant 0 : i32
      %8 = tpu.memref_slice %arg2[%7, %c0_i32_8] : memref<60x32xf32, #tpu.memory_space<any>> -> memref<1x32xf32, #tpu.memory_space<any>>
      %c0_i32_9 = arith.constant 0 : i32
      %9 = tpu.memref_slice %arg3[%4, %c0_i32_9] : memref<8x32xf32, #tpu.memory_space<vmem>> -> memref<1x32xf32, #tpu.memory_space<vmem>>
      %10 = tpu.memref_slice %arg4[%4] : memref<8x!tpu.dma_semaphore, #tpu.memory_space<semaphore_mem>> -> memref<1x!tpu.dma_semaphore, #tpu.memory_space<semaphore_mem>>
      %11 = tpu.memref_squeeze %10 : memref<1x!tpu.dma_semaphore, #tpu.memory_space<semaphore_mem>> -> memref<!tpu.dma_semaphore, #tpu.memory_space<semaphore_mem>>
      tpu.enqueue_dma source(%8 : memref<1x32xf32, #tpu.memory_space<any>>) target(%9 : memref<1x32xf32, #tpu.memory_space<vmem>>) target_semaphore(%11 : memref<!tpu.dma_semaphore, #tpu.memory_space<semaphore_mem>>)
    }
    %c8_i32_1 = arith.constant 8 : i32
    %c0_i32_2 = arith.constant 0 : i32
    %c8_i32_3 = arith.constant 8 : i32
    %2 = arith.addi %c0_i32_2, %c8_i32_3 : i32
    %c1_i32_4 = arith.constant 1 : i32
    scf.for %arg5 = %c0_i32_2 to %2 step %c1_i32_4  : i32 {
      %c1_i32_6 = arith.constant 1 : i32
      %3 = arith.muli %arg5, %c1_i32_6 : i32
      %c0_i32_7 = arith.constant 0 : i32
      %4 = arith.addi %c0_i32_7, %3 : i32
      %c8_i32_8 = arith.constant 8 : i32
      %c0_i32_9 = arith.constant 0 : i32
      %5 = arith.cmpi eq, %c8_i32_8, %c0_i32_9 : i32
      %c1_i32_10 = arith.constant 1 : i32
      %6 = arith.select %5, %c1_i32_10, %c8_i32_8 : i32
      %7 = arith.remsi %4, %6 : i32
      %c0_i32_11 = arith.constant 0 : i32
      %8 = arith.cmpi ne, %7, %c0_i32_11 : i32
      %c0_i32_12 = arith.constant 0 : i32
      %9 = arith.cmpi slt, %7, %c0_i32_12 : i32
      %c0_i32_13 = arith.constant 0 : i32
      %10 = arith.cmpi slt, %6, %c0_i32_13 : i32
      %11 = arith.xori %9, %10 : i1
      %12 = arith.andi %11, %8 : i1
      %13 = arith.addi %7, %6 : i32
      %14 = arith.select %12, %13, %7 : i32
      %15 = arith.addi %0, %4 : i32
      %16 = arith.index_cast %15 : i32 to index
      %17 = memref.load %arg1[%16] : memref<8xi32, #tpu.memory_space<smem>>
      %c0_i32_14 = arith.constant 0 : i32
      %18 = tpu.memref_slice %arg2[%17, %c0_i32_14] : memref<60x32xf32, #tpu.memory_space<any>> -> memref<1x32xf32, #tpu.memory_space<any>>
      %c0_i32_15 = arith.constant 0 : i32
      %19 = tpu.memref_slice %arg3[%4, %c0_i32_15] : memref<8x32xf32, #tpu.memory_space<vmem>> -> memref<1x32xf32, #tpu.memory_space<vmem>>
      %20 = tpu.memref_slice %arg4[%14] : memref<8x!tpu.dma_semaphore, #tpu.memory_space<semaphore_mem>> -> memref<1x!tpu.dma_semaphore, #tpu.memory_space<semaphore_mem>>
      %21 = tpu.memref_squeeze %20 : memref<1x!tpu.dma_semaphore, #tpu.memory_space<semaphore_mem>> -> memref<!tpu.dma_semaphore, #tpu.memory_space<semaphore_mem>>
      tpu.wait_dma2 semaphore(%21 : memref<!tpu.dma_semaphore, #tpu.memory_space<semaphore_mem>>) src(%18 : memref<1x32xf32, #tpu.memory_space<any>>) dst(%19 : memref<1x32xf32, #tpu.memory_space<vmem>>)
      %c8_i32_16 = arith.constant 8 : i32
      %22 = arith.addi %4, %c8_i32_16 : i32
      %c8_i32_17 = arith.constant 8 : i32
      %23 = arith.cmpi slt, %22, %c8_i32_17 : i32
      %24 = arith.extui %23 : i1 to i32
      %c0_i32_18 = arith.constant 0 : i32
      %25 = arith.cmpi ne, %24, %c0_i32_18 : i32
      scf.if %25 {
        %c8_i32_19 = arith.constant 8 : i32
        %26 = arith.addi %4, %c8_i32_19 : i32
        %27 = arith.addi %0, %26 : i32
        %28 = arith.index_cast %27 : i32 to index
        %29 = memref.load %arg1[%28] : memref<8xi32, #tpu.memory_space<smem>>
        %c0_i32_20 = arith.constant 0 : i32
        %30 = tpu.memref_slice %arg2[%29, %c0_i32_20] : memref<60x32xf32, #tpu.memory_space<any>> -> memref<1x32xf32, #tpu.memory_space<any>>
        %c0_i32_21 = arith.constant 0 : i32
        %31 = tpu.memref_slice %arg3[%26, %c0_i32_21] : memref<8x32xf32, #tpu.memory_space<vmem>> -> memref<1x32xf32, #tpu.memory_space<vmem>>
        %32 = tpu.memref_slice %arg4[%14] : memref<8x!tpu.dma_semaphore, #tpu.memory_space<semaphore_mem>> -> memref<1x!tpu.dma_semaphore, #tpu.memory_space<semaphore_mem>>
        %33 = tpu.memref_squeeze %32 : memref<1x!tpu.dma_semaphore, #tpu.memory_space<semaphore_mem>> -> memref<!tpu.dma_semaphore, #tpu.memory_space<semaphore_mem>>
        tpu.enqueue_dma source(%30 : memref<1x32xf32, #tpu.memory_space<any>>) target(%31 : memref<1x32xf32, #tpu.memory_space<vmem>>) target_semaphore(%33 : memref<!tpu.dma_semaphore, #tpu.memory_space<semaphore_mem>>)
      } else {
      }
    }
    %c8_i32_5 = arith.constant 8 : i32
    return
  }
  func.func @transform_1(%arg0: i32, %arg1: memref<8xi32, #tpu.memory_space<smem>>) -> (i32, i32) {
    %c0_i32 = arith.constant 0 : i32
    %c0_i32_0 = arith.constant 0 : i32
    return %arg0, %c0_i32 : i32, i32
  }
}

</mosaic_0001>

<llo_original>
// kernel: tpu_custom_call.1
$region0: #{tpu_custom_call.1}
  #allocation0 [shape = 'u32[]', space=smem, size = 0x4, offset = 0x4, fixed_abs, tag = 'smem constant byte address 0x4 - core index']
  #allocation1 [shape = 'u32[144,128]{1,0:T(1,128)}', space=vmem, size = 0x12000, scoped, tag = 'internal scratch']
  #allocation2 [shape = 's32[8]{0}', space=sflag, size = 0x20, scoped, tag = 'scratch operand']
  #allocation3 [shape = 's32[1]{0}', space=sflag, size = 0x4, scoped, tag = 'scoped memory for tpu_custom_call.1']
  #allocation4 [shape = 'u8[512]{0}', space=smem, size = 0x200, scoped, tag = 'prefetched SMEM operand 0']
  #allocation7 [shape = 's32[]', space=sflag, size = 0x4, offset = 0, fixed_abs, tag = 'sflag constant byte address 0x0 - dummy sync flag']
  #allocation8 [shape = 's32[]', space=sflag, size = 0x4, offset = 0, fixed_abs, tag = 'sflag constant byte address 0x0 - dummy sync flag']
  %s0 = inlined_call_operand.vmem [shape: s32[8], index: 0, kind: input, shape index: {}]
  %s1 = inlined_call_operand.vmem [shape: f32[60,32], index: 1, kind: input, shape index: {}]
  %s2 = inlined_call_operand.hbm [shape: f32[8,32], index: 2, kind: output, shape index: {}]
  %s3 = sld [smem:[#allocation0]]
  $region88: #{tpu_custom_call.1} parent=0
    _
  %s5 = ssub.s32 1, %s3
  %s6 = scalar_select 0, %s5, %s3
  %s7 = sshll.u32 %s0, 4
  %s8 = int_to_ptr.vmem [resolvable:$true] %s7
  %10 = dma.vmem_to_smem %s8, 16, [#allocation4], [#allocation3]
  %11 = dma.done [#allocation3], 16
  %12 = sfence
  $region1: #{tpu_custom_call.1} parent=0
    #allocation5 [shape = 'u8[4096]{0}', space=vmem, size = 0x1000, scoped, tag = 'output window, operand 0, single buffered']
    #allocation6 [shape = 's32[1]{0}', space=sflag, size = 0x4, scoped, tag = 'scoped memory for tpu_custom_call.1']
    %13 = vsyncpa [#allocation6], 0
    %s14 = smul.u32 0, 8
    loop: start=0, step=1, limit=8
    $region2: #{tpu_custom_call.1} parent=1 // loop_pre_header
      _
    $region3: #{tpu_custom_call.1} parent=1 // loop_header
      %s16 = sphi 0, %s20
      %p17 = scmp.ge.s32.totalorder %s16, 8
    $region4: #{tpu_custom_call.1} parent=1 // loop_header_branch
      %19 = sbr.rel (%p17) target = $region8
    $region5: #{tpu_custom_call.1} parent=1 // loop_body
      %s21 = sadd.s32 %s14, %s16
      %s22 = sld [smem:[#allocation4 + %s21]]
      %s23 = scalar_lea.vmem %s1, %s22
      %s24 = scalar_lea.vmem [#allocation5], %s16
      %s25 = scalar_lea.sflag [#allocation2], %s16
      %p27 = scmp.lt.u32.totalorder 1, 8
      %p28 = pneg %p27
      // Predicated region
      $region9: #{tpu_custom_call.1} parent=5 // pred_check
        _
      $region10: #{tpu_custom_call.1} parent=5 // pred_check_branch
        %30 = sbr.rel (%p27) target = $region12
      $region11: #{tpu_custom_call.1} parent=5 // pred_region
        %s46 = sand.u32 1, 7
        %p47 = scmp.eq.s32.totalorder %s46, 0
        %p48 = pneg %p47
        // Predicated region
        $region24: #{tpu_custom_call.1} parent=11 // pred_check
          _
        $region25: #{tpu_custom_call.1} parent=11 // pred_check_branch
          %50 = sbr.rel (%p47) target = $region27
        $region26: #{tpu_custom_call.1} parent=11 // pred_region
          %s51 = sand.u32 1, 7
          %s52 = ssub.s32 1, %s51
          %s53 = scalar_lea.vmem %s23, %s52
          %s54 = ssub.s32 1, %s51
          %s55 = scalar_lea.vmem %s24, %s54 [#allocation5]
          %s56 = sshll.u32 1, %s51
          %s57 = ssub.s32 %s56, 1
          loop: start=0, step=1, limit=1
          $region28: #{tpu_custom_call.1} parent=26 // loop_pre_header
            _
          $region29: #{tpu_custom_call.1} parent=26 // loop_header
            %s59 = sphi 0, %s63
            %p60 = scmp.ge.s32.totalorder %s59, 1
            %s64 = sphi %s53, %s53
            %s65 = sphi %s55, %s55
          $region30: #{tpu_custom_call.1} parent=26 // loop_header_branch
            %62 = sbr.rel (%p60) target = $region34
          $region31: #{tpu_custom_call.1} parent=26 // loop_body
            %v66 = vld [vmem:[%s64] sm:%s57]
            %67 = vst [vmem:[%s65] sm:%s57] %v66
          $region32: #{tpu_custom_call.1} parent=26 // loop_footer
            %s63 = sadd.s32 1, %s59
          $region33: #{tpu_custom_call.1} parent=26 // loop_footer_branch
            %58 = sbr.rel target = $region29
          $region34: #{tpu_custom_call.1} parent=26 // loop_exit
            _
        $region27: #{tpu_custom_call.1} parent=11 // pred_fallthru
          _
      $region12: #{tpu_custom_call.1} parent=5 // pred_fallthru
        _
      // Predicated region
      $region13: #{tpu_custom_call.1} parent=5 // pred_check
        %p31 = pneg %p27
      $region14: #{tpu_custom_call.1} parent=5 // pred_check_branch
        %33 = sbr.rel (%p31) target = $region16
      $region15: #{tpu_custom_call.1} parent=5 // pred_region
        %s34 = sshll.u32 1, 1
        %s35 = ssub.s32 %s34, 1
        loop: start=0, step=1, limit=1
        $region17: #{tpu_custom_call.1} parent=15 // loop_pre_header
          _
        $region18: #{tpu_custom_call.1} parent=15 // loop_header
          %s37 = sphi 0, %s41
          %p38 = scmp.ge.s32.totalorder %s37, 1
          %s42 = sphi %s23, %s23
          %s43 = sphi %s24, %s24
        $region19: #{tpu_custom_call.1} parent=15 // loop_header_branch
          %40 = sbr.rel (%p38) target = $region23
        $region20: #{tpu_custom_call.1} parent=15 // loop_body
          %v44 = vld [vmem:[%s42] sm:%s35]
          %45 = vst [vmem:[%s43] sm:%s35] %v44
        $region21: #{tpu_custom_call.1} parent=15 // loop_footer
          %s41 = sadd.s32 1, %s37
        $region22: #{tpu_custom_call.1} parent=15 // loop_footer_branch
          %36 = sbr.rel target = $region18
        $region23: #{tpu_custom_call.1} parent=15 // loop_exit
          _
      $region16: #{tpu_custom_call.1} parent=5 // pred_fallthru
        _
      // Predicated region
      $region35: #{tpu_custom_call.1} parent=5 // pred_check
        _
      $region36: #{tpu_custom_call.1} parent=5 // pred_check_branch
        %70 = sbr.rel (0) target = $region38
      $region37: #{tpu_custom_call.1} parent=5 // pred_region
        %71 = vsyncadd %s25, 16
      $region38: #{tpu_custom_call.1} parent=5 // pred_fallthru
        _
    $region6: #{tpu_custom_call.1} parent=1 // loop_footer
      %s20 = sadd.s32 1, %s16
    $region7: #{tpu_custom_call.1} parent=1 // loop_footer_branch
      %15 = sbr.rel target = $region3
    $region8: #{tpu_custom_call.1} parent=1 // loop_exit
      _
    loop: start=0, step=1, limit=8
    $region39: #{tpu_custom_call.1} parent=1 // loop_pre_header
      _
    $region40: #{tpu_custom_call.1} parent=1 // loop_header
      %s73 = sphi 0, %s77
      %p74 = scmp.ge.s32.totalorder %s73, 8
    $region41: #{tpu_custom_call.1} parent=1 // loop_header_branch
      %76 = sbr.rel (%p74) target = $region45
    $region42: #{tpu_custom_call.1} parent=1 // loop_body
      %p78 = scmp.lt.s32.totalorder %s73, 0
      %s79 = ssub.s32 0, %s73
      %s80 = scalar_select %p78, %s79, %s73
      %s81 = sand.u32 %s80, 7
      %s82 = ssub.s32 0, %s81
      %s83 = scalar_select %p78, %s82, %s81
      %p84 = scmp.ne.s32.totalorder %s83, 0
      %p85 = scmp.lt.s32.totalorder %s83, 0
      %p86 = pnand %p85, %p84
      %p87 = pneg %p86
      %s88 = sadd.s32 %s83, 8
      %s89 = scalar_select %p87, %s88, %s83
      %s90 = sadd.s32 %s14, %s73
      %s91 = sld [smem:[#allocation4 + %s90]]
      %s92 = scalar_lea.sflag [#allocation2], %s89
      %s93 = smul.u32 1, 1
      %s94 = sshll.u32 %s93, 4
      %95 = dma.done %s92, %s94
      %s96 = sadd.s32 %s73, 8
      %p97 = scmp.lt.s32.totalorder %s96, 8
      // Predicated region
      $region46: #{tpu_custom_call.1} parent=42 // pred_check
        %p98 = pneg %p97
      $region47: #{tpu_custom_call.1} parent=42 // pred_check_branch
        %100 = sbr.rel (%p98) target = $region49
      $region48: #{tpu_custom_call.1} parent=42 // pred_region
        %s101 = sadd.s32 %s14, %s96
        %s102 = sld [smem:[#allocation4 + %s101]]
        %s103 = scalar_lea.vmem %s1, %s102
        %s104 = scalar_lea.vmem [#allocation5], %s96
        %p106 = scmp.lt.u32.totalorder 1, 8
        %p107 = pneg %p106
        // Predicated region
        $region50: #{tpu_custom_call.1} parent=48 // pred_check
          _
        $region51: #{tpu_custom_call.1} parent=48 // pred_check_branch
          %109 = sbr.rel (%p106) target = $region53
        $region52: #{tpu_custom_call.1} parent=48 // pred_region
          %s125 = sand.u32 1, 7
          %p126 = scmp.eq.s32.totalorder %s125, 0
          %p127 = pneg %p126
          // Predicated region
          $region65: #{tpu_custom_call.1} parent=52 // pred_check
            _
          $region66: #{tpu_custom_call.1} parent=52 // pred_check_branch
            %129 = sbr.rel (%p126) target = $region68
          $region67: #{tpu_custom_call.1} parent=52 // pred_region
            %s130 = sand.u32 1, 7
            %s131 = ssub.s32 1, %s130
            %s132 = scalar_lea.vmem %s103, %s131
            %s133 = ssub.s32 1, %s130
            %s134 = scalar_lea.vmem %s104, %s133 [#allocation5]
            %s135 = sshll.u32 1, %s130
            %s136 = ssub.s32 %s135, 1
            loop: start=0, step=1, limit=1
            $region69: #{tpu_custom_call.1} parent=67 // loop_pre_header
              _
            $region70: #{tpu_custom_call.1} parent=67 // loop_header
              %s138 = sphi 0, %s142
              %p139 = scmp.ge.s32.totalorder %s138, 1
              %s143 = sphi %s132, %s132
              %s144 = sphi %s134, %s134
            $region71: #{tpu_custom_call.1} parent=67 // loop_header_branch
              %141 = sbr.rel (%p139) target = $region75
            $region72: #{tpu_custom_call.1} parent=67 // loop_body
              %v145 = vld [vmem:[%s143] sm:%s136]
              %146 = vst [vmem:[%s144] sm:%s136] %v145
            $region73: #{tpu_custom_call.1} parent=67 // loop_footer
              %s142 = sadd.s32 1, %s138
            $region74: #{tpu_custom_call.1} parent=67 // loop_footer_branch
              %137 = sbr.rel target = $region70
            $region75: #{tpu_custom_call.1} parent=67 // loop_exit
              _
          $region68: #{tpu_custom_call.1} parent=52 // pred_fallthru
            _
        $region53: #{tpu_custom_call.1} parent=48 // pred_fallthru
          _
        // Predicated region
        $region54: #{tpu_custom_call.1} parent=48 // pred_check
          %p110 = pneg %p106
        $region55: #{tpu_custom_call.1} parent=48 // pred_check_branch
          %112 = sbr.rel (%p110) target = $region57
        $region56: #{tpu_custom_call.1} parent=48 // pred_region
          %s113 = sshll.u32 1, 1
          %s114 = ssub.s32 %s113, 1
          loop: start=0, step=1, limit=1
          $region58: #{tpu_custom_call.1} parent=56 // loop_pre_header
            _
          $region59: #{tpu_custom_call.1} parent=56 // loop_header
            %s116 = sphi 0, %s120
            %p117 = scmp.ge.s32.totalorder %s116, 1
            %s121 = sphi %s103, %s103
            %s122 = sphi %s104, %s104
          $region60: #{tpu_custom_call.1} parent=56 // loop_header_branch
            %119 = sbr.rel (%p117) target = $region64
          $region61: #{tpu_custom_call.1} parent=56 // loop_body
            %v123 = vld [vmem:[%s121] sm:%s114]
            %124 = vst [vmem:[%s122] sm:%s114] %v123
          $region62: #{tpu_custom_call.1} parent=56 // loop_footer
            %s120 = sadd.s32 1, %s116
          $region63: #{tpu_custom_call.1} parent=56 // loop_footer_branch
            %115 = sbr.rel target = $region59
          $region64: #{tpu_custom_call.1} parent=56 // loop_exit
            _
        $region57: #{tpu_custom_call.1} parent=48 // pred_fallthru
          _
        // Predicated region
        $region76: #{tpu_custom_call.1} parent=48 // pred_check
          _
        $region77: #{tpu_custom_call.1} parent=48 // pred_check_branch
          %149 = sbr.rel (0) target = $region79
        $region78: #{tpu_custom_call.1} parent=48 // pred_region
          %150 = vsyncadd %s92, 16
        $region79: #{tpu_custom_call.1} parent=48 // pred_fallthru
          _
      $region49: #{tpu_custom_call.1} parent=42 // pred_fallthru
        _
    $region43: #{tpu_custom_call.1} parent=1 // loop_footer
      %s77 = sadd.s32 1, %s73
    $region44: #{tpu_custom_call.1} parent=1 // loop_footer_branch
      %72 = sbr.rel target = $region40
    $region45: #{tpu_custom_call.1} parent=1 // loop_exit
      _
    // Predicated region
    $region80: #{tpu_custom_call.1} parent=1 // pred_check
      _
    $region81: #{tpu_custom_call.1} parent=1 // pred_check_branch
      %152 = sbr.rel (0) target = $region83
    $region82: #{tpu_custom_call.1} parent=1 // pred_region
      %s154 = ssub.s32 128, 128
      %155 = vsyncadd [#allocation6], %s154
      %s157 = sshll.u32 [#allocation5], 4
      %s158 = int_to_ptr.vmem [resolvable:$true] %s157
      %160 = dma.vmem_to_hbm [thread:$0]  %s158, 128, %s2, [#allocation6]
    $region83: #{tpu_custom_call.1} parent=1 // pred_fallthru
      _
    // Predicated region
    $region84: #{tpu_custom_call.1} parent=1 // pred_check
      _
    $region85: #{tpu_custom_call.1} parent=1 // pred_check_branch
      %162 = sbr.rel (0) target = $region87
    $region86: #{tpu_custom_call.1} parent=1 // pred_region
      %163 = dma.done [#allocation6], 128
    $region87: #{tpu_custom_call.1} parent=1 // pred_fallthru
      _
    %164 = vsyncpa [#allocation6], 1
  %165 = vsyncmov [#allocation2]
  %s166 = vpop.sfrf %165
  %p167 = scmp.eq.s32.totalorder %s166, 0
  %p168 = pneg %p167
  %170 = shalt.err (%p168)
  %s171 = scalar_lea.sflag [#allocation2], 1
  %172 = vsyncmov %s171
  %s173 = vpop.sfrf %172
  %p174 = scmp.eq.s32.totalorder %s173, 0
  %p175 = pneg %p174
  %177 = shalt.err (%p175)
  %s178 = scalar_lea.sflag [#allocation2], 2
  %179 = vsyncmov %s178
  %s180 = vpop.sfrf %179
  %p181 = scmp.eq.s32.totalorder %s180, 0
  %p182 = pneg %p181
  %184 = shalt.err (%p182)
  %s185 = scalar_lea.sflag [#allocation2], 3
  %186 = vsyncmov %s185
  %s187 = vpop.sfrf %186
  %p188 = scmp.eq.s32.totalorder %s187, 0
  %p189 = pneg %p188
  %191 = shalt.err (%p189)
  %s192 = scalar_lea.sflag [#allocation2], 4
  %193 = vsyncmov %s192
  %s194 = vpop.sfrf %193
  %p195 = scmp.eq.s32.totalorder %s194, 0
  %p196 = pneg %p195
  %198 = shalt.err (%p196)
  %s199 = scalar_lea.sflag [#allocation2], 5
  %200 = vsyncmov %s199
  %s201 = vpop.sfrf %200
  %p202 = scmp.eq.s32.totalorder %s201, 0
  %p203 = pneg %p202
  %205 = shalt.err (%p203)
  %s206 = scalar_lea.sflag [#allocation2], 6
  %207 = vsyncmov %s206
  %s208 = vpop.sfrf %207
  %p209 = scmp.eq.s32.totalorder %s208, 0
  %p210 = pneg %p209
  %212 = shalt.err (%p210)
  %s213 = scalar_lea.sflag [#allocation2], 7
  %214 = vsyncmov %s213
  %s215 = vpop.sfrf %214
  %p216 = scmp.eq.s32.totalorder %s215, 0
  %p217 = pneg %p216
  %219 = shalt.err (%p217)

</llo_original>
